<compile_context>
chip_gen: v5e
topology: v5e:2x2
jax: 0.10.0
libtpu: 0.0.40
codegen_flags: <defaults>
</compile_context>

<pallas_src>
import functools

import jax
import jax.numpy as jnp
from jax.experimental import pallas as pl
from jax.experimental.pallas import tpu as pltpu

HIDDEN = 128
IN_FEATURES = 4
K_AUG = IN_FEATURES + 1          # features + folded fc1-bias row
LANE = 128


def _round_up(v, m):
    return (v + m - 1) // m * m


def _mlp_softmax_kernel(x_ref, w1_ref, w2_ref, b2_ref, o_ref, *, actions):
    # x:  (5, TB)   rows 0..3 = features, row 4 = ones (fc1 bias fold)
    # w1: (128, 5)  [fc1.weight | fc1.bias]
    # w2: (A, 128)  b2: (A, 1)   o: (A, TB)
    h = jnp.dot(w1_ref[...], x_ref[...], preferred_element_type=jnp.float32)
    h = jnp.maximum(h, 0.0)

    logits = (
        jnp.dot(w2_ref[...], h, preferred_element_type=jnp.float32) + b2_ref[...]
    )

    if actions == 2:
        # Two-class softmax == logistic sigmoid: one EUP exp + one reciprocal
        # per column, no max/sum (XLU) reductions over the action axis.
        # Saturates cleanly to (1, 0) / (0, 1) for large |l0 - l1|.
        d = logits[0:1, :] - logits[1:2, :]                   # l0 - l1, (1, TB)
        p1 = pl.reciprocal(1.0 + jnp.exp(d), approx=False)    # softmax prob of action 1
        p0 = 1.0 - p1                                         # softmax prob of action 0
        row = jax.lax.broadcasted_iota(jnp.int32, o_ref.shape, 0)
        o_ref[...] = jnp.where(row == 0, p0, p1).astype(o_ref.dtype)
    else:
        # General numerically-stable softmax over the action (sublane) axis.
        m = jnp.max(logits, axis=0, keepdims=True)
        e = jnp.exp(logits - m)
        denom = jnp.sum(e, axis=0, keepdims=True)
        o_ref[...] = (e * pl.reciprocal(denom, approx=False)).astype(o_ref.dtype)


def _pick_tile(batch_padded_min, block_batch):
    """Choose a lane-dense batch tile (multiple of 128) and the grid size."""
    # Correctness: block lane dim must be a multiple of 128 (or full extent),
    # so round the user-supplied cap DOWN to a multiple of 128 (min 128).
    bb = max(LANE, (int(block_batch) // LANE) * LANE)
    tb = min(bb, batch_padded_min)
    # Keep >= 2 grid steps whenever the batch allows so the "parallel" grid
    # axis can shard across v7x's two TensorCores.  (Keeping n_tiles even as
    # well would balance v7x perfectly, but we avoid the extra padded compute
    # that would cost single-core chips.)
    if batch_padded_min >= 2 * LANE and tb >= batch_padded_min:
        tb = _round_up(pl.cdiv(batch_padded_min, 2), LANE)
    n_tiles = pl.cdiv(batch_padded_min, tb)
    return tb, n_tiles


@functools.partial(jax.jit, static_argnames=("tb",))
def cartpole_forward_lanes(x_aug_t, w1_aug, w2, b2_col, *, tb):
    """Batch-on-lanes fast path (no wrapper-side layout plumbing).

    x_aug_t: (5, Bp) f32, Bp a multiple of tb; rows 0..3 = features^T, row 4 =
             1.0 for valid columns (fc1 bias fold), 0.0 for padding columns.
    w1_aug:  (128, 5) = [fc1.weight | fc1.bias];  w2: (A, 128);  b2_col: (A, 1)
    returns  (A, Bp) f32 column-wise softmax probabilities.
    """
    K, Bp = x_aug_t.shape
    A = w2.shape[0]
    if K != K_AUG:
        raise ValueError(f"expected {K_AUG} input rows (features + ones), got {K}")
    if tb % LANE or Bp % tb:
        raise ValueError("tb must be a multiple of 128 and divide the padded batch")
    n_tiles = Bp // tb

    cost = pl.CostEstimate(
        flops=2 * Bp * (K_AUG * HIDDEN + HIDDEN * A),
        transcendentals=Bp * (1 if A == 2 else A),
        bytes_accessed=4 * (Bp * (K_AUG + A) + K_AUG * HIDDEN + HIDDEN * A + A),
    )

    # Generous VMEM budget: double-buffered x/out tiles + the (128, tb) f32
    # hidden tile (plus one temp copy) ~ 1.25 KiB per batch element.  Clipped
    # to 48 MiB so it stays inside v7x's 64 MiB physical VMEM while raising
    # v5e's 16 MiB scoped default.
    vmem_limit = int(min(max(1280 * tb + (2 << 20), 32 << 20), 48 << 20))

    kernel = functools.partial(_mlp_softmax_kernel, actions=A)

    return pl.pallas_call(
        kernel,
        out_shape=jax.ShapeDtypeStruct((A, Bp), jnp.float32),
        grid_spec=pltpu.PrefetchScalarGridSpec(
            num_scalar_prefetch=0,
            grid=(n_tiles,),
            in_specs=[
                # streaming input tile: (5, tb) column block i
                pl.BlockSpec((K_AUG, tb), lambda i: (0, i)),
                # weights / bias: constant block index -> VMEM-resident
                pl.BlockSpec((HIDDEN, K_AUG), lambda i: (0, 0)),
                pl.BlockSpec((A, HIDDEN), lambda i: (0, 0)),
                pl.BlockSpec((A, 1), lambda i: (0, 0)),
            ],
            out_specs=pl.BlockSpec((A, tb), lambda i: (0, i)),
        ),
        compiler_params=pltpu.CompilerParams(
            dimension_semantics=("parallel",),
            vmem_limit_bytes=vmem_limit,
        ),
        cost_estimate=cost,
    )(x_aug_t, w1_aug, w2, b2_col)


@functools.partial(jax.jit, static_argnames=("block_batch",))
def cartpole_forward(x, w1, b1, w2, b2, *, block_batch=32768):
    """Forward pass matching nn.Linear(4,128)+ReLU+nn.Linear(128,A)+Softmax.

    x:  (B, 4) float32
    w1: (128, 4), b1: (128,)   -- PyTorch nn.Linear weight/bias convention
    w2: (A, 128), b2: (A,)
    returns (B, A) float32 probabilities (rows sum to 1).
    """
    B = x.shape[0]
    A = w2.shape[0]

    tb, n_tiles = _pick_tile(_round_up(B, LANE), block_batch)
    Bp = tb * n_tiles

    # Layout plumbing (one small fused copy, ~20*B bytes each way).  Callers
    # holding (features, batch)-major data can call cartpole_forward_lanes
    # directly and skip these launches entirely.
    x32 = x.astype(jnp.float32)
    x_aug = jnp.concatenate([x32, jnp.ones((B, 1), jnp.float32)], axis=1)   # (B, 5)
    x_aug_t = jnp.pad(x_aug.T, ((0, 0), (0, Bp - B)))                       # (5, Bp)

    w1_aug = jnp.concatenate(
        [w1.astype(jnp.float32), b1.reshape(HIDDEN, 1).astype(jnp.float32)], axis=1
    )                                                                       # (128, 5)
    b2_col = b2.reshape(A, 1).astype(jnp.float32)

    out_t = cartpole_forward_lanes(
        x_aug_t, w1_aug, w2.astype(jnp.float32), b2_col, tb=tb
    )

    # Drop batch padding, return PyTorch-style (B, A) (slice+transpose fuse).
    return out_t[:, :B].T


def init_params(key, actions):
    # Deterministic synthetic init, PyTorch nn.Linear shape convention:
    # weight (out, in), bias (out,).
    k1, k2, k3, k4 = jax.random.split(key, 4)
    w1 = jax.random.normal(k1, (HIDDEN, IN_FEATURES), dtype=jnp.float32) * 0.1
    b1 = jax.random.normal(k2, (HIDDEN,), dtype=jnp.float32) * 0.1
    w2 = jax.random.normal(k3, (actions, HIDDEN), dtype=jnp.float32) * 0.1
    b2 = jax.random.normal(k4, (actions,), dtype=jnp.float32) * 0.1
    return w1, b1, w2, b2


def _reference(x, w1, b1, w2, b2):
    h = jnp.maximum(x @ w1.T + b1, 0.0)
    logits = h @ w2.T + b2
    return jax.nn.softmax(logits, axis=1)


if __name__ == "__main__":
    key = jax.random.PRNGKey(0)
    k_params, k_x_small, k_x_big, k_params3, k_x3 = jax.random.split(key, 5)

    actions = 2  # CartPole: left / right
    w1, b1, w2, b2 = init_params(k_params, actions)

    # Small-shape check (single grid step, batch padded 8 -> 128 lanes).
    batch = 8
    x = jax.random.normal(k_x_small, (batch, IN_FEATURES), dtype=jnp.float32)
    out = jax.block_until_ready(cartpole_forward(x, w1, b1, w2, b2))
    ref = _reference(x, w1, b1, w2, b2)
    assert out.shape == (batch, actions)
    assert jnp.allclose(out, ref, atol=1e-5, rtol=1e-5), "mismatch vs reference (small)"
    assert jnp.allclose(jnp.sum(out, axis=1), 1.0, atol=1e-5), "rows must sum to 1"

    # Larger batch exercises the multi-tile "parallel" grid path (>= 2 tiles).
    big_batch = 1024
    xb = jax.random.normal(k_x_big, (big_batch, IN_FEATURES), dtype=jnp.float32)
    out_b = jax.block_until_ready(cartpole_forward(xb, w1, b1, w2, b2))
    ref_b = _reference(xb, w1, b1, w2, b2)
    assert out_b.shape == (big_batch, actions)
    assert jnp.allclose(out_b, ref_b, atol=1e-5, rtol=1e-5), "mismatch vs reference (big)"

    # actions > 2 exercises the general stable-softmax branch.
    w1c, b1c, w2c, b2c = init_params(k_params3, 3)
    xc = jax.random.normal(k_x3, (batch, IN_FEATURES), dtype=jnp.float32)
    out_c = jax.block_until_ready(cartpole_forward(xc, w1c, b1c, w2c, b2c))
    ref_c = _reference(xc, w1c, b1c, w2c, b2c)
    assert out_c.shape == (batch, 3)
    assert jnp.allclose(out_c, ref_c, atol=1e-5, rtol=1e-5), "mismatch vs reference (A=3)"
    assert jnp.allclose(jnp.sum(out_c, axis=1), 1.0, atol=1e-5), "rows must sum to 1 (A=3)"

    print("KERNEL_OK")
</pallas_src>

<mosaic_0001>
module attributes {stable_mosaic.version = 11 : i64} {
  func.func @_mlp_softmax_kernel(%arg0: i32, %arg1: memref<5x128xf32, #tpu.memory_space<vmem>>, %arg2: memref<128x5xf32, #tpu.memory_space<vmem>>, %arg3: memref<2x128xf32, #tpu.memory_space<vmem>>, %arg4: memref<2x1xf32, #tpu.memory_space<vmem>>, %arg5: memref<2x128xf32, #tpu.memory_space<vmem>>) attributes {dimension_semantics = [#tpu.dimension_semantics<parallel>], iteration_bounds = array<i64: 1>, scalar_prefetch = 0 : i64, scratch_operands = 0 : i64, tpu.core_type = #tpu.core_type<tc>, window_params = [{transform_indices = @transform_0, window_bounds = array<i64: 5, 128>}, {pipeline_mode = #tpu.pipeline_mode<synchronous>, transform_indices = @transform_1, window_bounds = array<i64: 128, 5>}, {pipeline_mode = #tpu.pipeline_mode<synchronous>, transform_indices = @transform_2, window_bounds = array<i64: 2, 128>}, {pipeline_mode = #tpu.pipeline_mode<synchronous>, transform_indices = @transform_3, window_bounds = array<i64: 2, 1>}, {transform_indices = @transform_4, window_bounds = array<i64: 2, 128>}]} {
    %c0 = arith.constant 0 : index
    %c0_0 = arith.constant 0 : index
    %0 = vector.load %arg2[%c0, %c0_0] : memref<128x5xf32, #tpu.memory_space<vmem>>, vector<128x5xf32>
    %c0_1 = arith.constant 0 : index
    %c0_2 = arith.constant 0 : index
    %1 = vector.load %arg1[%c0_1, %c0_2] : memref<5x128xf32, #tpu.memory_space<vmem>>, vector<5x128xf32>
    %cst = arith.constant dense<0.000000e+00> : vector<128x128xf32>
    %2 = tpu.matmul %0, %1, %cst {dimension_numbers = #tpu.dot_dimension_numbers<[1], [0], [0], [1], [0, 0, 1, 1], [], []>} : vector<128x5xf32>, vector<5x128xf32>, vector<128x128xf32> -> vector<128x128xf32>
    %cst_3 = arith.constant 0.000000e+00 : f32
    %3 = vector.broadcast %cst_3 : f32 to vector<128x128xf32>
    %4 = arith.maximumf %2, %3 : vector<128x128xf32>
    %c0_4 = arith.constant 0 : index
    %c0_5 = arith.constant 0 : index
    %5 = vector.load %arg3[%c0_4, %c0_5] : memref<2x128xf32, #tpu.memory_space<vmem>>, vector<2x128xf32>
    %cst_6 = arith.constant dense<0.000000e+00> : vector<2x128xf32>
    %6 = tpu.matmul %5, %4, %cst_6 {dimension_numbers = #tpu.dot_dimension_numbers<[1], [0], [0], [1], [0, 0, 1, 1], [], []>} : vector<2x128xf32>, vector<128x128xf32>, vector<2x128xf32> -> vector<2x128xf32>
    %c0_7 = arith.constant 0 : index
    %c0_8 = arith.constant 0 : index
    %7 = vector.load %arg4[%c0_7, %c0_8] : memref<2x1xf32, #tpu.memory_space<vmem>>, vector<2x1xf32>
    %8 = vector.broadcast %7 : vector<2x1xf32> to vector<2x128xf32>
    %9 = arith.addf %6, %8 : vector<2x128xf32>
    %10 = vector.extract_strided_slice %9 {offsets = [0, 0], sizes = [1, 128], strides = [1, 1]} : vector<2x128xf32> to vector<1x128xf32>
    %11 = vector.extract_strided_slice %9 {offsets = [1, 0], sizes = [1, 128], strides = [1, 1]} : vector<2x128xf32> to vector<1x128xf32>
    %12 = arith.subf %10, %11 : vector<1x128xf32>
    %13 = math.exp %12 : vector<1x128xf32>
    %cst_9 = arith.constant 1.000000e+00 : f32
    %14 = vector.broadcast %cst_9 : f32 to vector<1x128xf32>
    %15 = arith.addf %14, %13 : vector<1x128xf32>
    %16 = tpu.reciprocal %15 : vector<1x128xf32> -> vector<1x128xf32>
    %cst_10 = arith.constant 1.000000e+00 : f32
    %17 = vector.broadcast %cst_10 : f32 to vector<1x128xf32>
    %18 = arith.subf %17, %16 : vector<1x128xf32>
    %19 = tpu.iota {dimensions = array<i32: 0>} : vector<2x128xi32>
    %c0_i32 = arith.constant 0 : i32
    %20 = vector.broadcast %c0_i32 : i32 to vector<2x128xi32>
    %21 = arith.cmpi eq, %19, %20 : vector<2x128xi32>
    %22 = vector.shape_cast %18 : vector<1x128xf32> to vector<1x128xf32>
    %23 = vector.broadcast %22 : vector<1x128xf32> to vector<2x128xf32>
    %24 = vector.shape_cast %16 : vector<1x128xf32> to vector<1x128xf32>
    %25 = vector.broadcast %24 : vector<1x128xf32> to vector<2x128xf32>
    %26 = arith.select %21, %23, %25 : vector<2x128xi1>, vector<2x128xf32>
    %c0_11 = arith.constant 0 : index
    %c0_12 = arith.constant 0 : index
    %27 = vector.load %arg5[%c0_11, %c0_12] : memref<2x128xf32, #tpu.memory_space<vmem>>, vector<2x128xf32>
    tpu.vector_store %arg5[%c0_11, %c0_12], %26 {strides = array<i32>} : memref<2x128xf32, #tpu.memory_space<vmem>>, vector<2x128xf32>,
    return
  }
  func.func @transform_0(%arg0: i32) -> (i32, i32) {
    %c0_i32 = arith.constant 0 : i32
    %c0_i32_0 = arith.constant 0 : i32
    return %c0_i32, %arg0 : i32, i32
  }
  func.func @transform_1(%arg0: i32) -> (i32, i32) {
    %c0_i32 = arith.constant 0 : i32
    %c0_i32_0 = arith.constant 0 : i32
    %c0_i32_1 = arith.constant 0 : i32
    return %c0_i32, %c0_i32_0 : i32, i32
  }
  func.func @transform_2(%arg0: i32) -> (i32, i32) {
    %c0_i32 = arith.constant 0 : i32
    %c0_i32_0 = arith.constant 0 : i32
    %c0_i32_1 = arith.constant 0 : i32
    return %c0_i32, %c0_i32_0 : i32, i32
  }
  func.func @transform_3(%arg0: i32) -> (i32, i32) {
    %c0_i32 = arith.constant 0 : i32
    %c0_i32_0 = arith.constant 0 : i32
    %c0_i32_1 = arith.constant 0 : i32
    return %c0_i32, %c0_i32_0 : i32, i32
  }
  func.func @transform_4(%arg0: i32) -> (i32, i32) {
    %c0_i32 = arith.constant 0 : i32
    %c0_i32_0 = arith.constant 0 : i32
    return %c0_i32, %arg0 : i32, i32
  }
}

</mosaic_0001>

<llo_original>
// kernel: cartpole_forward_lanes.1
$region0: #{cartpole_forward_lanes.1}
  #allocation0 [shape = 'u32[]', space=smem, size = 0x4, offset = 0x4, fixed_abs, tag = 'smem constant byte address 0x4 - core index']
  #allocation1 [shape = 'u32[72,128]{1,0:T(1,128)}', space=vmem, size = 0x9000, scoped, tag = 'internal scratch']
  %s0 = inlined_call_operand.vmem [shape: f32[5,128], index: 0, kind: input, shape index: {}]
  %s1 = inlined_call_operand.vmem [shape: f32[128,5], index: 1, kind: input, shape index: {}]
  %s2 = inlined_call_operand.vmem [shape: f32[2,128], index: 2, kind: input, shape index: {}]
  %s3 = inlined_call_operand.vmem [shape: f32[2,1], index: 3, kind: input, shape index: {}]
  %s4 = inlined_call_operand.hbm [shape: f32[2,128], index: 4, kind: output, shape index: {}]
  %s5 = sld [smem:[#allocation0]]
  $region26: #{cartpole_forward_lanes.1} parent=0
    _
  %s7 = ssub.s32 1, %s5
  %s8 = scalar_select 0, %s7, %s5
  $region1: #{cartpole_forward_lanes.1} parent=0
    #allocation2 [shape = 'u8[1024]{0}', space=vmem, size = 0x400, scoped, tag = 'output window, operand 0, single buffered']
    #allocation3 [shape = 's32[1]{0}', space=sflag, size = 0x4, scoped, tag = 'scoped memory for cartpole_forward_lanes.1']
    %9 = vsyncpa [#allocation3], 0
    // Predicated region
    $region2: #{cartpole_forward_lanes.1} parent=1 // pred_check
      _
    $region3: #{cartpole_forward_lanes.1} parent=1 // pred_check_branch
      %11 = sbr.rel (0) target = $region5
    $region4: #{cartpole_forward_lanes.1} parent=1 // pred_region
      _
    $region5: #{cartpole_forward_lanes.1} parent=1 // pred_fallthru
      _
    // Predicated region
    $region6: #{cartpole_forward_lanes.1} parent=1 // pred_check
      _
    $region7: #{cartpole_forward_lanes.1} parent=1 // pred_check_branch
      %13 = sbr.rel (0) target = $region9
    $region8: #{cartpole_forward_lanes.1} parent=1 // pred_region
      _
    $region9: #{cartpole_forward_lanes.1} parent=1 // pred_fallthru
      _
    // Predicated region
    $region10: #{cartpole_forward_lanes.1} parent=1 // pred_check
      _
    $region11: #{cartpole_forward_lanes.1} parent=1 // pred_check_branch
      %15 = sbr.rel (0) target = $region13
    $region12: #{cartpole_forward_lanes.1} parent=1 // pred_region
      _
    $region13: #{cartpole_forward_lanes.1} parent=1 // pred_fallthru
      _
    // Predicated region
    $region14: #{cartpole_forward_lanes.1} parent=1 // pred_check
      _
    $region15: #{cartpole_forward_lanes.1} parent=1 // pred_check_branch
      %17 = sbr.rel (0) target = $region17
    $region16: #{cartpole_forward_lanes.1} parent=1 // pred_region
      _
    $region17: #{cartpole_forward_lanes.1} parent=1 // pred_fallthru
      _
    %v18 = vld [vmem:[%s1] sm:$0xff]
    %v19 = vld [vmem:[%s1 + $0x8] sm:$0xff]
    %v20 = vld [vmem:[%s1 + $0x10] sm:$0xff]
    %v21 = vld [vmem:[%s1 + $0x18] sm:$0xff]
    %v22 = vld [vmem:[%s1 + $0x20] sm:$0xff]
    %v23 = vld [vmem:[%s1 + $0x28] sm:$0xff]
    %v24 = vld [vmem:[%s1 + $0x30] sm:$0xff]
    %v25 = vld [vmem:[%s1 + $0x38] sm:$0xff]
    %v26 = vld [vmem:[%s1 + $0x40] sm:$0xff]
    %v27 = vld [vmem:[%s1 + $0x48] sm:$0xff]
    %v28 = vld [vmem:[%s1 + $0x50] sm:$0xff]
    %v29 = vld [vmem:[%s1 + $0x58] sm:$0xff]
    %v30 = vld [vmem:[%s1 + $0x60] sm:$0xff]
    %v31 = vld [vmem:[%s1 + $0x68] sm:$0xff]
    %v32 = vld [vmem:[%s1 + $0x70] sm:$0xff]
    %v33 = vld [vmem:[%s1 + $0x78] sm:$0xff]
    %v34 = vld [vmem:[%s0] sm:$0x1f]
    %vm35 = vcmask 39936
    %v37 = vsel %vm35, %v18, 0
    %v40 = vsel %vm35, %v19, 0
    %v43 = vsel %vm35, %v20, 0
    %v46 = vsel %vm35, %v21, 0
    %v49 = vsel %vm35, %v22, 0
    %v52 = vsel %vm35, %v23, 0
    %v55 = vsel %vm35, %v24, 0
    %v58 = vsel %vm35, %v25, 0
    %v61 = vsel %vm35, %v26, 0
    %v64 = vsel %vm35, %v27, 0
    %v67 = vsel %vm35, %v28, 0
    %v70 = vsel %vm35, %v29, 0
    %v73 = vsel %vm35, %v30, 0
    %v76 = vsel %vm35, %v31, 0
    %v79 = vsel %vm35, %v32, 0
    %v82 = vsel %vm35, %v33, 0
    %vm84 = vcmask 1044480
    %v86 = vsel %vm84, %v34, 0
    %88 = vmatpush.msra.mxu0 0.0
    %89 = vmatpush.msra.mxu0 0.0
    %90 = vmatpush.msra.mxu0 0.0
    %91 = vmatpush.msra.mxu0 0.0
    %92 = vmatpush.msra.mxu0 0.0
    %93 = vmatpush.msra.mxu0 0.0
    %94 = vmatpush.msra.mxu0 0.0
    %95 = vmatpush.msra.mxu0 0.0
    %96 = vmatpush.msra.mxu0 0.0
    %97 = vmatpush.msra.mxu0 0.0
    %98 = vmatpush.msra.mxu0 0.0
    %99 = vmatpush.msra.mxu0 0.0
    %100 = vmatpush.msra.mxu0 0.0
    %101 = vmatpush.msra.mxu0 0.0
    %102 = vmatpush.msra.mxu0 0.0
    %103 = vmatpush.msra.mxu0 %v86
    %104 = vmatmul.f32.gmra.mxu0 %v37
    %v105 = vpop.f32.mrf.mxu0
    %v106 = vadd.f32 0.0, %v105
    %107 = vmatmul.f32.gmra.mxu0 %v40
    %v108 = vpop.f32.mrf.mxu0
    %v109 = vadd.f32 0.0, %v108
    %110 = vmatmul.f32.gmra.mxu0 %v43
    %v111 = vpop.f32.mrf.mxu0
    %v112 = vadd.f32 0.0, %v111
    %113 = vmatmul.f32.gmra.mxu0 %v46
    %v114 = vpop.f32.mrf.mxu0
    %v115 = vadd.f32 0.0, %v114
    %116 = vmatmul.f32.gmra.mxu0 %v49
    %v117 = vpop.f32.mrf.mxu0
    %v118 = vadd.f32 0.0, %v117
    %119 = vmatmul.f32.gmra.mxu0 %v52
    %v120 = vpop.f32.mrf.mxu0
    %v121 = vadd.f32 0.0, %v120
    %122 = vmatmul.f32.gmra.mxu0 %v55
    %v123 = vpop.f32.mrf.mxu0
    %v124 = vadd.f32 0.0, %v123
    %125 = vmatmul.f32.gmra.mxu0 %v58
    %v126 = vpop.f32.mrf.mxu0
    %v127 = vadd.f32 0.0, %v126
    %128 = vmatmul.f32.gmra.mxu0 %v61
    %v129 = vpop.f32.mrf.mxu0
    %v130 = vadd.f32 0.0, %v129
    %131 = vmatmul.f32.gmra.mxu0 %v64
    %v132 = vpop.f32.mrf.mxu0
    %v133 = vadd.f32 0.0, %v132
    %134 = vmatmul.f32.gmra.mxu0 %v67
    %v135 = vpop.f32.mrf.mxu0
    %v136 = vadd.f32 0.0, %v135
    %137 = vmatmul.f32.gmra.mxu0 %v70
    %v138 = vpop.f32.mrf.mxu0
    %v139 = vadd.f32 0.0, %v138
    %140 = vmatmul.f32.gmra.mxu0 %v73
    %v141 = vpop.f32.mrf.mxu0
    %v142 = vadd.f32 0.0, %v141
    %143 = vmatmul.f32.gmra.mxu0 %v76
    %v144 = vpop.f32.mrf.mxu0
    %v145 = vadd.f32 0.0, %v144
    %146 = vmatmul.f32.gmra.mxu0 %v79
    %v147 = vpop.f32.mrf.mxu0
    %v148 = vadd.f32 0.0, %v147
    %149 = vmatmul.f32.gmra.mxu0 %v82
    %v150 = vpop.f32.mrf.mxu0
    %v151 = vadd.f32 0.0, %v150
    %152 = vdwg.mxu0
    %v153 = vmax.f32 %v106, 0.0
    %v154 = vmax.f32 %v109, 0.0
    %v155 = vmax.f32 %v112, 0.0
    %v156 = vmax.f32 %v115, 0.0
    %v157 = vmax.f32 %v118, 0.0
    %v158 = vmax.f32 %v121, 0.0
    %v159 = vmax.f32 %v124, 0.0
    %v160 = vmax.f32 %v127, 0.0
    %v161 = vmax.f32 %v130, 0.0
    %v162 = vmax.f32 %v133, 0.0
    %v163 = vmax.f32 %v136, 0.0
    %v164 = vmax.f32 %v139, 0.0
    %v165 = vmax.f32 %v142, 0.0
    %v166 = vmax.f32 %v145, 0.0
    %v167 = vmax.f32 %v148, 0.0
    %v168 = vmax.f32 %v151, 0.0
    %v169 = vld [vmem:[%s2] sm:$0x3]
    %v170 = vld [vmem:[%s3] sm:$0x3]
    %172 = vset.pattern.permute.xlu0 0
    %173 = vperm.xlu0 %172, %v170
    %v174 = vpop.permute.xlu0 %173
    %176 = vmatpush.msra.mxu0 %v168
    %177 = vmatpush.msra.mxu0 %v167
    %178 = vmatpush.msra.mxu0 %v166
    %179 = vmatpush.msra.mxu0 %v165
    %180 = vmatpush.msra.mxu0 %v164
    %181 = vmatpush.msra.mxu0 %v163
    %182 = vmatpush.msra.mxu0 %v162
    %183 = vmatpush.msra.mxu0 %v161
    %184 = vmatpush.msra.mxu0 %v160
    %185 = vmatpush.msra.mxu0 %v159
    %186 = vmatpush.msra.mxu0 %v158
    %187 = vmatpush.msra.mxu0 %v157
    %188 = vmatpush.msra.mxu0 %v156
    %189 = vmatpush.msra.mxu0 %v155
    %190 = vmatpush.msra.mxu0 %v154
    %191 = vmatpush.msra.mxu0 %v153
    %192 = vmatmul.f32.gmra.mxu0 %v169
    %v193 = vpop.f32.mrf.mxu0
    %v194 = vadd.f32 %v174, %v193
    %195 = vdwg.mxu0
    %v197 = vrot.slane %v194, 1
    %v199 = vsub.f32 %v194, %v197
    %v200 = vmul.f32 %v199, 1.442695
    %v201 = vpow.pop %v200
    %v202 = vadd.f32 %v201, 1.0
    %v203 = vrcp.pop %v202
    %v204 = vmul.f32 %v202, %v203
    %v205 = vsub.f32 1.0, %v204
    %v206 = vmul.f32 %v203, %v205
    %v207 = vadd.f32 %v203, %v206
    %vm208 = vweird.f32 %v202
    %vm209 = vweird.f32 %v203
    %vm210 = vmor %vm208, %vm209
    %v211 = vsel %vm210, %v203, %v207
    %v212 = vand.u32 2147483647, %v202
    %vm213 = vcmp.eq.f32.partialorder %v212, 8.507059e+37
    %v214 = vand.u32 %v202, 2147483648
    %v215 = vor.u32 1.1754944e-38, %v214
    %v216 = vsel %vm213, %v215, %v211
    %v217 = vsub.f32 1.0, %v216
    %v218 = vlaneseq
    %v219 = vshrl.u32 %v218, 7
    %vm220 = vcmp.eq.s32.totalorder %v219, 0
    %v221 = vperm.slane %v217, 0
    %v222 = vperm.slane %v216, 0
    %v223 = vsel %vm220, %v221, %v222
    %224 = vst [vmem:[#allocation2] sm:$0x3] %v223
    // Predicated region
    $region18: #{cartpole_forward_lanes.1} parent=1 // pred_check
      _
    $region19: #{cartpole_forward_lanes.1} parent=1 // pred_check_branch
      %226 = sbr.rel (0) target = $region21
    $region20: #{cartpole_forward_lanes.1} parent=1 // pred_region
      %228 = vsyncadd [#allocation3], 0
      %s230 = sshll.u32 [#allocation2], 4
      %s231 = int_to_ptr.vmem [resolvable:$true] %s230
      %s232 = sshll.u32 %s4, 4
      %s233 = int_to_ptr.hbm [resolvable:$true] %s232
      %235 = dma.vmem_to_hbm [thread:$0]  %s231, 32, %s233, [#allocation3]
    $region21: #{cartpole_forward_lanes.1} parent=1 // pred_fallthru
      _
    // Predicated region
    $region22: #{cartpole_forward_lanes.1} parent=1 // pred_check
      _
    $region23: #{cartpole_forward_lanes.1} parent=1 // pred_check_branch
      %237 = sbr.rel (0) target = $region25
    $region24: #{cartpole_forward_lanes.1} parent=1 // pred_region
      %239 = dma.done [#allocation3], 32
    $region25: #{cartpole_forward_lanes.1} parent=1 // pred_fallthru
      _
    %240 = vsyncpa [#allocation3], 1

</llo_original>
